<compile_context>
chip_gen: v7x
topology: tpu7x:2x2x1
jax: 0.10.0
libtpu: 0.0.40
codegen_flags: <defaults>
</compile_context>

<pallas_src>
import functools

import jax
import jax.numpy as jnp
from jax import lax
from jax.experimental import pallas as pl
from jax.experimental.pallas import tpu as pltpu


def _fused_conv_lrelu_kernel(p_ref, w_ref, b_ref, o_ref, acc_ref, *, negative_slope):
    """Grid = (num_m, num_k); K (reduction) axis is last / 'arbitrary'.

    p_ref:   (TM, TK)        bf16 im2col patch tile
    w_ref:   (TK, Cout_p)    bf16 weight tile
    b_ref:   (1, Cout_p)     f32 lane-padded bias
    o_ref:   (TM, Cout_p)    output tile (written on the last K step)
    acc_ref: (TM, Cout_p)    f32 accumulator scratch
    """
    k = pl.program_id(1)

    @pl.when(k == 0)
    def _():
        acc_ref[...] = jnp.zeros_like(acc_ref)

    acc_ref[...] += jnp.dot(p_ref[...], w_ref[...],
                            preferred_element_type=jnp.float32)

    @pl.when(k == pl.num_programs(1) - 1)
    def _():
        y = acc_ref[...] + b_ref[...]                       # f32 epilogue
        o_ref[...] = jnp.where(y > 0, y, negative_slope * y).astype(o_ref.dtype)


def _round_up(x, m):
    return ((x + m - 1) // m) * m


def _vmem_capacity_bytes():
    try:
        return int(pltpu.get_tpu_info().vmem_capacity_bytes)
    except Exception:
        return 64 * 1024 * 1024            # conservative: v7x per-TC VMEM


def _pick_tiles(m_total, k_red, cout_p, in_bytes, out_bytes, vmem_cap):
    """VMEM-budget-driven (TM, TK) selection + padded extents."""
    # K tile: keep whole K when modest; otherwise 2048-wide (multiple of 128) chunks
    # so the resident weight block stays small on v7x (64 MiB physical VMEM).
    tk = k_red if k_red <= 2048 else 2048
    k_pad = _round_up(k_red, tk)
    num_k = k_pad // tk

    budget = int(vmem_cap * 0.45)          # leave >half for compiler scratch / headroom
    fixed = 2 * tk * cout_p * in_bytes + 2 * cout_p * 4                 # weights + bias (2-deep)
    per_tm = 2 * tk * in_bytes + 2 * cout_p * out_bytes + cout_p * 4    # patches + out (2-deep) + acc

    tm = 8
    for cand in (8, 16, 32, 64, 128, 256, 512, 1024, 2048, 4096):
        if fixed + cand * per_tm > budget:
            break                           # would blow the VMEM budget
        if cand > max(8, m_total):
            break                           # pure padding beyond the real rows
        if m_total > 8 and -(-m_total // cand) < 2:
            break                           # keep >= 2 M-steps so both v7x TCs get work
        tm = cand
    m_pad = _round_up(m_total, tm)
    return tm, m_pad, tk, k_pad, num_k


def conv_block_forward(x_nchw, weight_oihw, bias, *, stride, padding,
                       negative_slope=0.2, compute_dtype=jnp.bfloat16,
                       allow_fusion=True):
    """Conv2d(stride, padding) + LeakyReLU(0.2), matching nn.Conv2d semantics."""
    N, Cin, H, W = x_nchw.shape
    Cout, Cin_w, KH, KW = weight_oihw.shape
    assert Cin == Cin_w

    Ho = (H + 2 * padding - KH) // stride + 1
    Wo = (W + 2 * padding - KW) // stride + 1
    out_dtype = x_nchw.dtype

    # ---- glue (plain JAX, runs once): layout, bf16 cast, im2col ----------------
    x_nhwc = jnp.transpose(x_nchw, (0, 2, 3, 1)).astype(compute_dtype)   # NHWC, bf16
    x_pad = jnp.pad(x_nhwc, ((0, 0), (padding, padding),
                             (padding, padding), (0, 0)))

    taps = []
    for kh in range(KH):
        for kw in range(KW):
            taps.append(lax.slice(
                x_pad,
                start_indices=(0, kh, kw, 0),
                limit_indices=(N, kh + (Ho - 1) * stride + 1,
                               kw + (Wo - 1) * stride + 1, Cin),
                strides=(1, stride, stride, 1)))                         # (N, Ho, Wo, Cin)
    patches = jnp.stack(taps, axis=3)                                    # (N, Ho, Wo, KH*KW, Cin)
    K_red = KH * KW * Cin
    M_total = N * Ho * Wo
    patches = patches.reshape(M_total, K_red)                            # im2col matrix (bf16)

    # Weights -> (KH*KW*Cin, Cout), same (kh, kw, cin) ordering as patches.
    w_mat = jnp.transpose(weight_oihw, (2, 3, 1, 0)).reshape(K_red, Cout)
    w_mat = w_mat.astype(compute_dtype)

    # Lane-dense output channels (no-op when Cout % 128 == 0).
    Cout_p = _round_up(Cout, 128)

    in_bytes = jnp.dtype(compute_dtype).itemsize
    out_bytes = jnp.dtype(out_dtype).itemsize
    vmem_cap = _vmem_capacity_bytes()
    TM, M_pad, TK, K_pad, num_k = _pick_tiles(
        M_total, K_red, Cout_p, in_bytes, out_bytes, vmem_cap)
    num_m = M_pad // TM

    if (M_pad, K_pad) != (M_total, K_red):
        patches = jnp.pad(patches, ((0, M_pad - M_total), (0, K_pad - K_red)))
    w_p = jnp.pad(w_mat, ((0, K_pad - K_red), (0, Cout_p - Cout)))
    b_p = jnp.pad(bias.astype(jnp.float32), (0, Cout_p - Cout)).reshape(1, Cout_p)

    # VMEM limit from the actual double-buffered tile footprint (+ headroom),
    # capped below physical VMEM (64 MiB on v7x, 128 MiB on v5e/v6e).
    tile_bytes = (2 * TM * TK * in_bytes + 2 * TK * Cout_p * in_bytes
                  + 2 * TM * Cout_p * out_bytes + TM * Cout_p * 4
                  + 2 * Cout_p * 4)
    vmem_limit = max(32 * 1024 * 1024, int(tile_bytes * 1.4) + 4 * 1024 * 1024)
    vmem_limit = min(vmem_limit, vmem_cap - 2 * 1024 * 1024)

    kernel = functools.partial(_fused_conv_lrelu_kernel,
                               negative_slope=negative_slope)

    compiler_params = pltpu.CompilerParams(
        dimension_semantics=("parallel", "arbitrary"),
        vmem_limit_bytes=vmem_limit,
        # Allow XLA to fuse the im2col producer into the patch operand (index 0)
        # instead of materializing it in HBM; weights/bias stay as-is.
        allow_input_fusion=[True, False, False] if allow_fusion else None,
    )

    out_mat = pl.pallas_call(
        kernel,
        out_shape=jax.ShapeDtypeStruct((M_pad, Cout_p), out_dtype),
        grid_spec=pltpu.PrefetchScalarGridSpec(
            num_scalar_prefetch=0,
            grid=(num_m, num_k),
            in_specs=[
                pl.BlockSpec((TM, TK), lambda i, k: (i, k)),
                pl.BlockSpec((TK, Cout_p), lambda i, k: (k, 0)),
                pl.BlockSpec((1, Cout_p), lambda i, k: (0, 0)),
            ],
            out_specs=pl.BlockSpec((TM, Cout_p), lambda i, k: (i, 0)),
            scratch_shapes=[pltpu.VMEM((TM, Cout_p), jnp.float32)],
        ),
        compiler_params=compiler_params,
    )(patches, w_p, b_p)

    # Slice real rows/channels, restore (N, Ho, Wo, Cout), return NCHW like PyTorch.
    # (When chaining ConvBlocks, keep NHWC and fold the channel slice into the next
    #  layer's im2col instead of materializing these extra passes.)
    out_nhwc = out_mat[:M_total, :Cout].reshape(N, Ho, Wo, Cout)
    return jnp.transpose(out_nhwc, (0, 3, 1, 2))


def _reference(x_nchw, weight_oihw, bias, *, stride, padding, negative_slope=0.2):
    y = lax.conv_general_dilated(
        x_nchw, weight_oihw,
        window_strides=(stride, stride),
        padding=((padding, padding), (padding, padding)),
        dimension_numbers=("NCHW", "OIHW", "NCHW"),
    ) + bias.reshape(1, -1, 1, 1)
    return jnp.where(y > 0, y, negative_slope * y)


if __name__ == "__main__":
    # Small discriminator-style ConvBlock: Conv2d(4 -> 8, k=4, stride=2, pad=1)
    N, Cin, H, W = 2, 4, 16, 16
    Cout, K, stride, padding = 8, 4, 2, 1

    key = jax.random.PRNGKey(0)
    kx, kw, kb = jax.random.split(key, 3)

    x = jax.random.normal(kx, (N, Cin, H, W), dtype=jnp.float32)
    # Deterministic init (roughly PyTorch's kaiming-uniform scale).
    fan_in = Cin * K * K
    bound = 1.0 / (fan_in ** 0.5)
    weight = jax.random.uniform(kw, (Cout, Cin, K, K), jnp.float32, -bound, bound)
    bias = jax.random.uniform(kb, (Cout,), jnp.float32, -bound, bound)

    def run(allow_fusion):
        fwd = jax.jit(functools.partial(conv_block_forward, stride=stride,
                                        padding=padding,
                                        allow_fusion=allow_fusion))
        return jax.block_until_ready(fwd(x, weight, bias))

    try:
        out = run(True)
    except Exception:
        # Conservative fallback: identical kernel without the input-fusion hint.
        out = run(False)

    # Reference on bf16-rounded operands (kernel multiplies in bf16, accumulates f32).
    xq = x.astype(jnp.bfloat16).astype(jnp.float32)
    wq = weight.astype(jnp.bfloat16).astype(jnp.float32)
    ref = _reference(xq, wq, bias, stride=stride, padding=padding)

    Ho = (H + 2 * padding - K) // stride + 1
    Wo = (W + 2 * padding - K) // stride + 1
    assert out.shape == (N, Cout, Ho, Wo)
    assert jnp.allclose(out, ref, rtol=1e-2, atol=1e-2), float(
        jnp.max(jnp.abs(out - ref)))

    print("KERNEL_OK")
</pallas_src>

<mosaic_0001>
module attributes {stable_mosaic.version = 11 : i64} {
  func.func @_fused_conv_lrelu_kernel(%arg0: i32, %arg1: i32, %arg2: memref<64x64xbf16, #tpu.memory_space<vmem>>, %arg3: memref<64x128xbf16, #tpu.memory_space<vmem>>, %arg4: memref<1x128xf32, #tpu.memory_space<vmem>>, %arg5: memref<64x128xf32, #tpu.memory_space<vmem>>, %arg6: memref<64x128xf32, #tpu.memory_space<vmem>>) attributes {dimension_semantics = [#tpu.dimension_semantics<parallel>, #tpu.dimension_semantics<arbitrary>], iteration_bounds = array<i64: 2, 1>, scalar_prefetch = 0 : i64, scratch_operands = 1 : i64, tpu.core_type = #tpu.core_type<tc>, window_params = [{transform_indices = @transform_0, window_bounds = array<i64: 64, 64>}, {transform_indices = @transform_1, window_bounds = array<i64: 64, 128>}, {pipeline_mode = #tpu.pipeline_mode<synchronous>, transform_indices = @transform_2, window_bounds = array<i64: 1, 128>}, {transform_indices = @transform_3, window_bounds = array<i64: 64, 128>}]} {
    %c0_i32 = arith.constant 0 : i32
    %0 = arith.cmpi eq, %arg1, %c0_i32 : i32
    %1 = arith.extui %0 : i1 to i32
    %c0_i32_0 = arith.constant 0 : i32
    %2 = arith.cmpi ne, %1, %c0_i32_0 : i32
    scf.if %2 {
      %cst_10 = arith.constant 0.000000e+00 : f32
      %12 = vector.broadcast %cst_10 : f32 to vector<64x128xf32>
      %c0_11 = arith.constant 0 : index
      %c0_12 = arith.constant 0 : index
      %13 = vector.load %arg6[%c0_11, %c0_12] : memref<64x128xf32, #tpu.memory_space<vmem>>, vector<64x128xf32>
      tpu.vector_store %arg6[%c0_11, %c0_12], %12 {strides = array<i32>} : memref<64x128xf32, #tpu.memory_space<vmem>>, vector<64x128xf32>,
    } else {
    }
    %c0 = arith.constant 0 : index
    %c0_1 = arith.constant 0 : index
    %3 = vector.load %arg6[%c0, %c0_1] : memref<64x128xf32, #tpu.memory_space<vmem>>, vector<64x128xf32>
    %c0_2 = arith.constant 0 : index
    %c0_3 = arith.constant 0 : index
    %4 = vector.load %arg2[%c0_2, %c0_3] : memref<64x64xbf16, #tpu.memory_space<vmem>>, vector<64x64xbf16>
    %c0_4 = arith.constant 0 : index
    %c0_5 = arith.constant 0 : index
    %5 = vector.load %arg3[%c0_4, %c0_5] : memref<64x128xbf16, #tpu.memory_space<vmem>>, vector<64x128xbf16>
    %cst = arith.constant dense<0.000000e+00> : vector<64x128xf32>
    %6 = tpu.matmul %4, %5, %cst {dimension_numbers = #tpu.dot_dimension_numbers<[1], [0], [0], [1], [0, 0, 1, 1], [], []>} : vector<64x64xbf16>, vector<64x128xbf16>, vector<64x128xf32> -> vector<64x128xf32>
    %7 = arith.addf %3, %6 : vector<64x128xf32>
    %c0_6 = arith.constant 0 : index
    %c0_7 = arith.constant 0 : index
    %8 = vector.load %arg6[%c0_6, %c0_7] : memref<64x128xf32, #tpu.memory_space<vmem>>, vector<64x128xf32>
    tpu.vector_store %arg6[%c0_6, %c0_7], %7 {strides = array<i32>} : memref<64x128xf32, #tpu.memory_space<vmem>>, vector<64x128xf32>,
    %c0_i32_8 = arith.constant 0 : i32
    %9 = arith.cmpi eq, %arg1, %c0_i32_8 : i32
    %10 = arith.extui %9 : i1 to i32
    %c0_i32_9 = arith.constant 0 : i32
    %11 = arith.cmpi ne, %10, %c0_i32_9 : i32
    scf.if %11 {
      %c0_10 = arith.constant 0 : index
      %c0_11 = arith.constant 0 : index
      %12 = vector.load %arg6[%c0_10, %c0_11] : memref<64x128xf32, #tpu.memory_space<vmem>>, vector<64x128xf32>
      %c0_12 = arith.constant 0 : index
      %c0_13 = arith.constant 0 : index
      %13 = vector.load %arg4[%c0_12, %c0_13] : memref<1x128xf32, #tpu.memory_space<vmem>>, vector<1x128xf32>
      %14 = vector.broadcast %13 : vector<1x128xf32> to vector<64x128xf32>
      %15 = arith.addf %12, %14 : vector<64x128xf32>
      %cst_14 = arith.constant 0.000000e+00 : f32
      %16 = vector.broadcast %cst_14 : f32 to vector<64x128xf32>
      %17 = arith.cmpf ogt, %15, %16 : vector<64x128xf32>
      %cst_15 = arith.constant 2.000000e-01 : f32
      %18 = vector.broadcast %cst_15 : f32 to vector<64x128xf32>
      %19 = arith.mulf %18, %15 : vector<64x128xf32>
      %20 = arith.select %17, %15, %19 : vector<64x128xi1>, vector<64x128xf32>
      %c0_16 = arith.constant 0 : index
      %c0_17 = arith.constant 0 : index
      %21 = vector.load %arg5[%c0_16, %c0_17] : memref<64x128xf32, #tpu.memory_space<vmem>>, vector<64x128xf32>
      tpu.vector_store %arg5[%c0_16, %c0_17], %20 {strides = array<i32>} : memref<64x128xf32, #tpu.memory_space<vmem>>, vector<64x128xf32>,
    } else {
    }
    return
  }
  func.func @transform_0(%arg0: i32, %arg1: i32) -> (i32, i32) {
    %c0_i32 = arith.constant 0 : i32
    return %arg0, %arg1 : i32, i32
  }
  func.func @transform_1(%arg0: i32, %arg1: i32) -> (i32, i32) {
    %c0_i32 = arith.constant 0 : i32
    %c0_i32_0 = arith.constant 0 : i32
    return %arg1, %c0_i32 : i32, i32
  }
  func.func @transform_2(%arg0: i32, %arg1: i32) -> (i32, i32) {
    %c0_i32 = arith.constant 0 : i32
    %c0_i32_0 = arith.constant 0 : i32
    %c0_i32_1 = arith.constant 0 : i32
    return %c0_i32, %c0_i32_0 : i32, i32
  }
  func.func @transform_3(%arg0: i32, %arg1: i32) -> (i32, i32) {
    %c0_i32 = arith.constant 0 : i32
    %c0_i32_0 = arith.constant 0 : i32
    return %arg0, %c0_i32 : i32, i32
  }
}

module attributes {stable_mosaic.version = 11 : i64} {
  func.func @_fused_conv_lrelu_kernel(%arg0: i32, %arg1: i32, %arg2: memref<64x64xbf16, #tpu.memory_space<vmem>>, %arg3: memref<64x128xbf16, #tpu.memory_space<vmem>>, %arg4: memref<1x128xf32, #tpu.memory_space<vmem>>, %arg5: memref<64x128xf32, #tpu.memory_space<vmem>>, %arg6: memref<64x128xf32, #tpu.memory_space<vmem>>) attributes {dimension_semantics = [#tpu.dimension_semantics<parallel>, #tpu.dimension_semantics<arbitrary>], iteration_bounds = array<i64: 2, 1>, scalar_prefetch = 0 : i64, scratch_operands = 1 : i64, tpu.core_type = #tpu.core_type<tc>, window_params = [{transform_indices = @transform_0, window_bounds = array<i64: 64, 64>}, {transform_indices = @transform_1, window_bounds = array<i64: 64, 128>}, {pipeline_mode = #tpu.pipeline_mode<synchronous>, transform_indices = @transform_2, window_bounds = array<i64: 1, 128>}, {transform_indices = @transform_3, window_bounds = array<i64: 64, 128>}]} {
    %c0_i32 = arith.constant 0 : i32
    %0 = arith.cmpi eq, %arg1, %c0_i32 : i32
    %1 = arith.extui %0 : i1 to i32
    %c0_i32_0 = arith.constant 0 : i32
    %2 = arith.cmpi ne, %1, %c0_i32_0 : i32
    scf.if %2 {
      %cst_10 = arith.constant 0.000000e+00 : f32
      %12 = vector.broadcast %cst_10 : f32 to vector<64x128xf32>
      %c0_11 = arith.constant 0 : index
      %c0_12 = arith.constant 0 : index
      %13 = vector.load %arg6[%c0_11, %c0_12] : memref<64x128xf32, #tpu.memory_space<vmem>>, vector<64x128xf32>
      tpu.vector_store %arg6[%c0_11, %c0_12], %12 {strides = array<i32>} : memref<64x128xf32, #tpu.memory_space<vmem>>, vector<64x128xf32>,
    } else {
    }
    %c0 = arith.constant 0 : index
    %c0_1 = arith.constant 0 : index
    %3 = vector.load %arg6[%c0, %c0_1] : memref<64x128xf32, #tpu.memory_space<vmem>>, vector<64x128xf32>
    %c0_2 = arith.constant 0 : index
    %c0_3 = arith.constant 0 : index
    %4 = vector.load %arg2[%c0_2, %c0_3] : memref<64x64xbf16, #tpu.memory_space<vmem>>, vector<64x64xbf16>
    %c0_4 = arith.constant 0 : index
    %c0_5 = arith.constant 0 : index
    %5 = vector.load %arg3[%c0_4, %c0_5] : memref<64x128xbf16, #tpu.memory_space<vmem>>, vector<64x128xbf16>
    %cst = arith.constant dense<0.000000e+00> : vector<64x128xf32>
    %6 = tpu.matmul %4, %5, %cst {dimension_numbers = #tpu.dot_dimension_numbers<[1], [0], [0], [1], [0, 0, 1, 1], [], []>} : vector<64x64xbf16>, vector<64x128xbf16>, vector<64x128xf32> -> vector<64x128xf32>
    %7 = arith.addf %3, %6 : vector<64x128xf32>
    %c0_6 = arith.constant 0 : index
    %c0_7 = arith.constant 0 : index
    %8 = vector.load %arg6[%c0_6, %c0_7] : memref<64x128xf32, #tpu.memory_space<vmem>>, vector<64x128xf32>
    tpu.vector_store %arg6[%c0_6, %c0_7], %7 {strides = array<i32>} : memref<64x128xf32, #tpu.memory_space<vmem>>, vector<64x128xf32>,
    %c0_i32_8 = arith.constant 0 : i32
    %9 = arith.cmpi eq, %arg1, %c0_i32_8 : i32
    %10 = arith.extui %9 : i1 to i32
    %c0_i32_9 = arith.constant 0 : i32
    %11 = arith.cmpi ne, %10, %c0_i32_9 : i32
    scf.if %11 {
      %c0_10 = arith.constant 0 : index
      %c0_11 = arith.constant 0 : index
      %12 = vector.load %arg6[%c0_10, %c0_11] : memref<64x128xf32, #tpu.memory_space<vmem>>, vector<64x128xf32>
      %c0_12 = arith.constant 0 : index
      %c0_13 = arith.constant 0 : index
      %13 = vector.load %arg4[%c0_12, %c0_13] : memref<1x128xf32, #tpu.memory_space<vmem>>, vector<1x128xf32>
      %14 = vector.broadcast %13 : vector<1x128xf32> to vector<64x128xf32>
      %15 = arith.addf %12, %14 : vector<64x128xf32>
      %cst_14 = arith.constant 0.000000e+00 : f32
      %16 = vector.broadcast %cst_14 : f32 to vector<64x128xf32>
      %17 = arith.cmpf ogt, %15, %16 : vector<64x128xf32>
      %cst_15 = arith.constant 2.000000e-01 : f32
      %18 = vector.broadcast %cst_15 : f32 to vector<64x128xf32>
      %19 = arith.mulf %18, %15 : vector<64x128xf32>
      %20 = arith.select %17, %15, %19 : vector<64x128xi1>, vector<64x128xf32>
      %c0_16 = arith.constant 0 : index
      %c0_17 = arith.constant 0 : index
      %21 = vector.load %arg5[%c0_16, %c0_17] : memref<64x128xf32, #tpu.memory_space<vmem>>, vector<64x128xf32>
      tpu.vector_store %arg5[%c0_16, %c0_17], %20 {strides = array<i32>} : memref<64x128xf32, #tpu.memory_space<vmem>>, vector<64x128xf32>,
    } else {
    }
    return
  }
  func.func @transform_0(%arg0: i32, %arg1: i32) -> (i32, i32) {
    %c0_i32 = arith.constant 0 : i32
    return %arg0, %arg1 : i32, i32
  }
  func.func @transform_1(%arg0: i32, %arg1: i32) -> (i32, i32) {
    %c0_i32 = arith.constant 0 : i32
    %c0_i32_0 = arith.constant 0 : i32
    return %arg1, %c0_i32 : i32, i32
  }
  func.func @transform_2(%arg0: i32, %arg1: i32) -> (i32, i32) {
    %c0_i32 = arith.constant 0 : i32
    %c0_i32_0 = arith.constant 0 : i32
    %c0_i32_1 = arith.constant 0 : i32
    return %c0_i32, %c0_i32_0 : i32, i32
  }
  func.func @transform_3(%arg0: i32, %arg1: i32) -> (i32, i32) {
    %c0_i32 = arith.constant 0 : i32
    %c0_i32_0 = arith.constant 0 : i32
    return %arg0, %c0_i32 : i32, i32
  }
}

</mosaic_0001>

<llo_original>
// kernel: conv_block_forward.1
$region0: #{conv_block_forward.1}
  #allocation0 [shape = 'u32[]', space=smem, size = 0x4, offset = 0x4, fixed_abs, tag = 'smem constant byte address 0x4 - core index']
  #allocation1 [shape = 'u32[144,128]{1,0:T(1,128)}', space=vmem, size = 0x12000, scoped, tag = 'internal scratch']
  #allocation2 [shape = 'f32[64,128]{1,0:T(8,128)}', space=vmem, size = 0x8000, scoped, tag = 'scratch operand']
  %s0 = inlined_call_operand.vmem [shape: bf16[128,64], index: 0, kind: input, shape index: {}]
  %s1 = inlined_call_operand.vmem [shape: bf16[64,128], index: 1, kind: input, shape index: {}]
  %s2 = inlined_call_operand.vmem [shape: f32[1,128], index: 2, kind: input, shape index: {}]
  %s3 = inlined_call_operand.vmem [shape: f32[128,128], index: 3, kind: output, shape index: {}]
  %s4 = sld [smem:[#allocation0]]
  $region53: #{conv_block_forward.1} parent=0
    _
  %s6 = ssub.s32 1, %s4
  %s7 = scalar_select 0, %s6, %s4
  loop: start=0, step=1, limit=4
  $region2: #{conv_block_forward.1} parent=0 // loop_pre_header
    _
  $region3: #{conv_block_forward.1} parent=0 // loop_header
    %s9 = sphi 0, %s13
    %p10 = scmp.ge.s32.totalorder %s9, 4
    %s16 = sphi 0, %s28
    %s17 = sphi 0, %s24
    %s18 = sphi 0, %s16
    %s19 = sphi 0, %s17
    %s20 = sphi 0, %s18
    %s21 = sphi 0, %s19
    %s33 = sphi 0, %s35
    %s36 = sphi 0, %s33
    %s37 = sphi 0, %s36
    %s53 = sphi 0, %s37
    %s59 = sphi 0, %s61
    %s62 = sphi 0, %s59
    %s63 = sphi 0, %s62
    %s79 = sphi 0, %s63
    %s83 = sphi 0, %s83
    %s85 = sphi 0, %s83
    %s86 = sphi 0, %s85
    %s100 = sphi 0, %s86
    %s106 = sphi 0, %s108
    %s109 = sphi 0, %s106
    %s110 = sphi 0, %s109
    %s126 = sphi 0, %s110
  $region4: #{conv_block_forward.1} parent=0 // loop_header_branch
    %12 = sbr.rel (%p10) target = $region8
  $region5: #{conv_block_forward.1} parent=0 // loop_body
    %s14 = ssub.s32 %s9, 1
    %s15 = ssub.s32 %s9, 2
    %s22 = sadd.s32 1, %s17
    %p23 = scmp.ge.s32.totalorder %s22, 1
    %s24 = scalar_select %p23, 0, %s22
    %s25 = sadd.s32 1, %s16
    %s26 = scalar_select %p23, %s25, %s16
    %p27 = scmp.ge.s32.totalorder %s26, 2
    %s28 = scalar_select %p27, 0, %s26
    %s29 = ssub.s32 %s16, %s28
    %s30 = ssub.s32 %s17, %s24
    %s31 = sor.u32 %s29, %s30
    %p32 = scmp.eq.s32.totalorder %s31, 0
    %s34 = sadd.s32 %s33, 1
    %s35 = scalar_select %p32, %s33, %s34
    %p38 = pneg %p32
    %p39 = scmp.eq.s32.totalorder %s9, 1
    %p40 = por %p38, %p39
    %p41 = scmp.ne.s32.totalorder %s33, %s36
    %p42 = scmp.eq.s32.totalorder %s9, 0
    %p43 = por %p41, %p42
    %p44 = scmp.ne.s32.totalorder %s33, %s36
    %p45 = scmp.eq.s32.totalorder %s14, 1
    %p46 = por %p44, %p45
    %p47 = scmp.ne.s32.totalorder %s36, %s37
    %p48 = scmp.eq.s32.totalorder %s14, 0
    %p49 = por %p47, %p48
    %p50 = scmp.ne.s32.totalorder %s36, %s37
    %p51 = scmp.eq.s32.totalorder %s15, 1
    %p52 = por %p50, %p51
    %p54 = scmp.ne.s32.totalorder %s37, %s53
    %p55 = scmp.eq.s32.totalorder %s15, 0
    %p56 = por %p54, %p55
    %s57 = ssub.s32 %s17, %s24
    %p58 = scmp.eq.s32.totalorder %s57, 0
    %s60 = sadd.s32 %s59, 1
    %s61 = scalar_select %p58, %s59, %s60
    %p64 = pneg %p58
    %p65 = scmp.eq.s32.totalorder %s9, 1
    %p66 = por %p64, %p65
    %p67 = scmp.ne.s32.totalorder %s59, %s62
    %p68 = scmp.eq.s32.totalorder %s9, 0
    %p69 = por %p67, %p68
    %p70 = scmp.ne.s32.totalorder %s59, %s62
    %p71 = scmp.eq.s32.totalorder %s14, 1
    %p72 = por %p70, %p71
    %p73 = scmp.ne.s32.totalorder %s62, %s63
    %p74 = scmp.eq.s32.totalorder %s14, 0
    %p75 = por %p73, %p74
    %p76 = scmp.ne.s32.totalorder %s62, %s63
    %p77 = scmp.eq.s32.totalorder %s15, 1
    %p78 = por %p76, %p77
    %p80 = scmp.ne.s32.totalorder %s63, %s79
    %p81 = scmp.eq.s32.totalorder %s15, 0
    %p82 = por %p80, %p81
    %s84 = sadd.s32 %s83, 1
    %p87 = scmp.eq.s32.totalorder %s9, 1
    %p88 = scmp.ne.s32.totalorder %s83, %s85
    %p89 = scmp.eq.s32.totalorder %s9, 0
    %p90 = por %p88, %p89
    %p91 = scmp.ne.s32.totalorder %s83, %s85
    %p92 = scmp.eq.s32.totalorder %s14, 1
    %p93 = por %p91, %p92
    %p94 = scmp.ne.s32.totalorder %s85, %s86
    %p95 = scmp.eq.s32.totalorder %s14, 0
    %p96 = por %p94, %p95
    %p97 = scmp.ne.s32.totalorder %s85, %s86
    %p98 = scmp.eq.s32.totalorder %s15, 1
    %p99 = por %p97, %p98
    %p101 = scmp.ne.s32.totalorder %s86, %s100
    %p102 = scmp.eq.s32.totalorder %s15, 0
    %p103 = por %p101, %p102
    %s104 = ssub.s32 %s16, %s28
    %p105 = scmp.eq.s32.totalorder %s104, 0
    %s107 = sadd.s32 %s106, 1
    %s108 = scalar_select %p105, %s106, %s107
    %p111 = pneg %p105
    %p112 = scmp.eq.s32.totalorder %s9, 1
    %p113 = por %p111, %p112
    %p114 = scmp.ne.s32.totalorder %s106, %s109
    %p115 = scmp.eq.s32.totalorder %s9, 0
    %p116 = por %p114, %p115
    %p117 = scmp.ne.s32.totalorder %s106, %s109
    %p118 = scmp.eq.s32.totalorder %s14, 1
    %p119 = por %p117, %p118
    %p120 = scmp.ne.s32.totalorder %s109, %s110
    %p121 = scmp.eq.s32.totalorder %s14, 0
    %p122 = por %p120, %p121
    %p123 = scmp.ne.s32.totalorder %s109, %s110
    %p124 = scmp.eq.s32.totalorder %s15, 1
    %p125 = por %p123, %p124
    %p127 = scmp.ne.s32.totalorder %s110, %s126
    %p128 = scmp.eq.s32.totalorder %s15, 0
    %p129 = por %p127, %p128
    %p130 = scmp.le.s32.totalorder 1, %s9
    %p131 = scmp.lt.s32.totalorder %s9, 3
    %p132 = pnand %p130, %p131
    %p133 = pneg %p132
    // Predicated region
    $region9: #{conv_block_forward.1} parent=5 // pred_check
      _
    $region10: #{conv_block_forward.1} parent=5 // pred_check_branch
      %135 = sbr.rel (%p132) target = $region12
    $region11: #{conv_block_forward.1} parent=5 // pred_region
      %s136 = ssub.s32 %s9, 1
      // Predicated region
      $region13: #{conv_block_forward.1} parent=11 // pred_check
        %p137 = pneg %p75
      $region14: #{conv_block_forward.1} parent=11 // pred_check_branch
        %139 = sbr.rel (%p137) target = $region16
      $region15: #{conv_block_forward.1} parent=11 // pred_region
        %s140 = smul.u32 8, %s19
        %p141 = scmp.lt.s32.totalorder %s140, 7
        %s142 = scalar_select %p141, %s140, 7
        %s143 = smul.addr %s142, 4
        %s144 = scalar_lea.vmem %s1, %s143
        %s145 = smul.u32 8, %s19
      $region16: #{conv_block_forward.1} parent=11 // pred_fallthru
        _
      // Predicated region
      $region17: #{conv_block_forward.1} parent=11 // pred_check
        %p146 = pneg %p96
      $region18: #{conv_block_forward.1} parent=11 // pred_check_branch
        %148 = sbr.rel (%p146) target = $region20
      $region19: #{conv_block_forward.1} parent=11 // pred_region
        _
      $region20: #{conv_block_forward.1} parent=11 // pred_fallthru
        _
    $region12: #{conv_block_forward.1} parent=5 // pred_fallthru
      _
    %p149 = scmp.lt.s32.totalorder %s9, 2
    // Predicated region
    $region21: #{conv_block_forward.1} parent=5 // pred_check
      %p150 = pneg %p149
    $region22: #{conv_block_forward.1} parent=5 // pred_check_branch
      %152 = sbr.rel (%p150) target = $region24
    $region23: #{conv_block_forward.1} parent=5 // pred_region
      // Predicated region
      $region25: #{conv_block_forward.1} parent=23 // pred_check
        %p153 = pneg %p43
      $region26: #{conv_block_forward.1} parent=23 // pred_check_branch
        %155 = sbr.rel (%p153) target = $region28
      $region27: #{conv_block_forward.1} parent=23 // pred_region
        %s156 = smul.u32 8, %s16
        %p157 = scmp.lt.s32.totalorder %s156, 15
        %s158 = scalar_select %p157, %s156, 15
        %p159 = scmp.lt.s32.totalorder %s17, 0
        %s160 = scalar_select %p159, %s17, 0
        %s161 = sadd.s32 %s160, %s158
        %s162 = smul.addr %s161, 4
        %s163 = scalar_lea.vmem %s0, %s162
        %s164 = smul.u32 8, %s16
      $region28: #{conv_block_forward.1} parent=23 // pred_fallthru
        _
    $region24: #{conv_block_forward.1} parent=5 // pred_fallthru
      _
    %p165 = scmp.le.s32.totalorder 1, %s9
    %p166 = scmp.lt.s32.totalorder %s9, 3
    %p167 = pnand %p165, %p166
    %p168 = pneg %p167
    // Predicated region
    $region29: #{conv_block_forward.1} parent=5 // pred_check
      _
    $region30: #{conv_block_forward.1} parent=5 // pred_check_branch
      %170 = sbr.rel (%p167) target = $region32
    $region31: #{conv_block_forward.1} parent=5 // pred_region
      %s171 = ssub.s32 %s9, 1
      %s172 = smul.u32 8, %s18
      %p173 = scmp.lt.s32.totalorder %s172, 15
      %s174 = scalar_select %p173, %s172, 15
      %p175 = scmp.lt.s32.totalorder %s19, 0
      %s176 = scalar_select %p175, %s19, 0
      %s177 = sadd.s32 %s176, %s174
      %s178 = smul.addr %s177, 4
      %s179 = scalar_lea.vmem %s0, %s178
      %p180 = pneg %p49
      %p181 = pneg %p46
      %s182 = smul.u32 8, %s19
      %p183 = scmp.lt.s32.totalorder %s182, 7
      %s184 = scalar_select %p183, %s182, 7
      %s185 = smul.addr %s184, 4
      %s186 = scalar_lea.vmem %s1, %s185
      %p187 = pneg %p75
      %p188 = pneg %p72
      %p189 = pneg %p96
      %p190 = pneg %p93
      %p191 = pneg %p122
      %p192 = pneg %p119
      %s193 = smul.u32 8, %s18
      %p194 = scmp.lt.s32.totalorder %s193, 15
      %s195 = scalar_select %p194, %s193, 15
      %s196 = smul.addr %s195, 8
      %s197 = scalar_lea.vmem %s3, %s196
      %s198 = smul.u32 8, %s18
      %p199 = scmp.lt.s32.totalorder %s198, 15
      %s200 = scalar_select %p199, %s198, 15
      %p201 = scmp.lt.s32.totalorder %s19, 0
      %s202 = scalar_select %p201, %s19, 0
      %s203 = sadd.s32 %s202, %s200
      %s204 = smul.addr %s203, 4
      %s205 = scalar_lea.vmem %s0, %s204
      %s206 = smul.u32 8, %s18
      %s207 = smul.u32 8, %s19
      %p208 = scmp.lt.s32.totalorder %s207, 7
      %s209 = scalar_select %p208, %s207, 7
      %s210 = smul.addr %s209, 4
      %s211 = scalar_lea.vmem %s1, %s210
      %s212 = smul.u32 8, %s19
      %s213 = smul.u32 8, %s18
      %p214 = scmp.lt.s32.totalorder %s213, 15
      %s215 = scalar_select %p214, %s213, 15
      %s216 = smul.addr %s215, 8
      %s217 = scalar_lea.vmem %s3, %s216
      %s218 = smul.u32 8, %s18
      %p220 = scmp.eq.s32.totalorder %s19, 0
      // Predicated region
      $region33: #{conv_block_forward.1} parent=31 // pred_check
        %p221 = pneg %p220
      $region34: #{conv_block_forward.1} parent=31 // pred_check_branch
        %223 = sbr.rel (%p221) target = $region36
      $region35: #{conv_block_forward.1} parent=31 // pred_region
        %224 = vst [vmem:[#allocation2] sm:$0xff] 0.0
        %225 = vst [vmem:[#allocation2 + $0x8] sm:$0xff] 0.0
        %226 = vst [vmem:[#allocation2 + $0x10] sm:$0xff] 0.0
        %227 = vst [vmem:[#allocation2 + $0x18] sm:$0xff] 0.0
        %228 = vst [vmem:[#allocation2 + $0x20] sm:$0xff] 0.0
        %229 = vst [vmem:[#allocation2 + $0x28] sm:$0xff] 0.0
        %230 = vst [vmem:[#allocation2 + $0x30] sm:$0xff] 0.0
        %231 = vst [vmem:[#allocation2 + $0x38] sm:$0xff] 0.0
      $region36: #{conv_block_forward.1} parent=31 // pred_fallthru
        _
      %v232 = vld [vmem:[#allocation2] sm:$0xff]
      %v233 = vld [vmem:[#allocation2 + $0x8] sm:$0xff]
      %v234 = vld [vmem:[#allocation2 + $0x10] sm:$0xff]
      %v235 = vld [vmem:[#allocation2 + $0x18] sm:$0xff]
      %v236 = vld [vmem:[#allocation2 + $0x20] sm:$0xff]
      %v237 = vld [vmem:[#allocation2 + $0x28] sm:$0xff]
      %v238 = vld [vmem:[#allocation2 + $0x30] sm:$0xff]
      %v239 = vld [vmem:[#allocation2 + $0x38] sm:$0xff]
      %v240 = vld [vmem:[%s205] sm:$0xf]
      %v241 = vld [vmem:[%s205 + $0x4] sm:$0xf]
      %v242 = vld [vmem:[%s205 + $0x8] sm:$0xf]
      %v243 = vld [vmem:[%s205 + $0xc] sm:$0xf]
      %v244 = vld [vmem:[%s205 + $0x10] sm:$0xf]
      %v245 = vld [vmem:[%s205 + $0x14] sm:$0xf]
      %v246 = vld [vmem:[%s205 + $0x18] sm:$0xf]
      %v247 = vld [vmem:[%s205 + $0x1c] sm:$0xf]
      %v248 = vld [vmem:[%s211] sm:$0xf]
      %v249 = vld [vmem:[%s211 + $0x4] sm:$0xf]
      %v250 = vld [vmem:[%s211 + $0x8] sm:$0xf]
      %v251 = vld [vmem:[%s211 + $0xc] sm:$0xf]
      %v252 = vld [vmem:[%s211 + $0x10] sm:$0xf]
      %v253 = vld [vmem:[%s211 + $0x14] sm:$0xf]
      %v254 = vld [vmem:[%s211 + $0x18] sm:$0xf]
      %v255 = vld [vmem:[%s211 + $0x1c] sm:$0xf]
      %v264 = vunpack.c.l.b16 %v240
      %v265 = vunpack.c.l.b16 %v241
      %v266 = vunpack.c.l.b16 %v242
      %v267 = vunpack.c.l.b16 %v243
      %v268 = vunpack.c.l.b16 %v244
      %v269 = vunpack.c.l.b16 %v245
      %v270 = vunpack.c.l.b16 %v246
      %v271 = vunpack.c.l.b16 %v247
      %v272 = vpack.c.b16 %v265, %v264
      %v273 = vpack.c.b16 %v267, %v266
      %v274 = vpack.c.b16 %v269, %v268
      %v275 = vpack.c.b16 %v271, %v270
      %v284 = vunpack.c.l.b16 %v248
      %v285 = vunpack.c.l.b16 %v249
      %v286 = vunpack.c.l.b16 %v250
      %v287 = vunpack.c.l.b16 %v251
      %v288 = vunpack.c.l.b16 %v252
      %v289 = vunpack.c.l.b16 %v253
      %v290 = vunpack.c.l.b16 %v254
      %v291 = vunpack.c.l.b16 %v255
      %v292 = vpack.c.b16 %v285, %v284
      %v293 = vpack.c.b16 %v287, %v286
      %v294 = vpack.c.b16 %v289, %v288
      %v295 = vpack.c.b16 %v291, %v290
      %vm300 = vcmask 523264
      %v302 = vsel %vm300, %v272, 0
      %v305 = vsel %vm300, %v273, 0
      %v308 = vsel %vm300, %v274, 0
      %v311 = vsel %vm300, %v275, 0
      %313 = vmatprep.subr.bf16.mxu0 0
      %314 = vmatpush1.bf16.msra.mxu0 %v292
      %315 = vmatprep.subr.bf16.mxu0 0
      %316 = vmatpush1.bf16.msra.mxu0 %v293
      %317 = vmatprep.subr.bf16.mxu0 0
      %318 = vmatpush1.bf16.msra.mxu0 %v294
      %319 = vmatprep.subr.bf16.mxu0 0
      %320 = vmatpush1.bf16.msra.mxu0 %v295
      %321 = vmatprep.subr.bf16.mxu0 0
      %322 = vmatpush1.bf16.msra.mxu0 0
      %323 = vmatprep.subr.bf16.mxu0 0
      %324 = vmatpush1.bf16.msra.mxu0 0
      %325 = vmatprep.subr.bf16.mxu0 0
      %326 = vmatpush1.bf16.msra.mxu0 0
      %327 = vmatprep.subr.bf16.mxu0 0
      %328 = vmatpush1.bf16.msra.mxu0 0
      %329 = vmatprep.subr.bf16.mxu0 0
      %330 = vmatpush1.bf16.msra.mxu0 0
      %331 = vmatprep.subr.bf16.mxu0 0
      %332 = vmatpush1.bf16.msra.mxu0 0
      %333 = vmatprep.subr.bf16.mxu0 0
      %334 = vmatpush1.bf16.msra.mxu0 0
      %335 = vmatprep.subr.bf16.mxu0 0
      %336 = vmatpush1.bf16.msra.mxu0 0
      %337 = vmatprep.subr.bf16.mxu0 0
      %338 = vmatpush1.bf16.msra.mxu0 0
      %339 = vmatprep.subr.bf16.mxu0 0
      %340 = vmatpush1.bf16.msra.mxu0 0
      %341 = vmatprep.subr.bf16.mxu0 0
      %342 = vmatpush1.bf16.msra.mxu0 0
      %343 = vmatprep.subr.bf16.mxu0 0
      %344 = vmatpush1.bf16.msra.mxu0 0
      %345 = vmatprep.mubr.bf16.mxu0 0
      %346 = vmatmul.mubr.bf16.gmra.mrb[0].mxu0 %v302
      %v347 = vpop.f32.mrb[0].mxu0
      %v348 = vadd.f32 0.0, %v347
      %v349 = vpop.f32.mrb[0].mxu0
      %v350 = vpop.f32.mrb[0].mxu0
      %v351 = vadd.f32 0.0, %v350
      %v352 = vpop.f32.mrb[0].mxu0
      %353 = vmatprep.mubr.bf16.mxu0 0
      %354 = vmatmul.mubr.bf16.gmra.mrb[0].mxu0 %v305
      %v355 = vpop.f32.mrb[0].mxu0
      %v356 = vadd.f32 0.0, %v355
      %v357 = vpop.f32.mrb[0].mxu0
      %v358 = vpop.f32.mrb[0].mxu0
      %v359 = vadd.f32 0.0, %v358
      %v360 = vpop.f32.mrb[0].mxu0
      %361 = vmatprep.mubr.bf16.mxu0 0
      %362 = vmatmul.mubr.bf16.gmra.mrb[0].mxu0 %v308
      %v363 = vpop.f32.mrb[0].mxu0
      %v364 = vadd.f32 0.0, %v363
      %v365 = vpop.f32.mrb[0].mxu0
      %v366 = vpop.f32.mrb[0].mxu0
      %v367 = vadd.f32 0.0, %v366
      %v368 = vpop.f32.mrb[0].mxu0
      %369 = vmatprep.mubr.bf16.mxu0 0
      %370 = vmatmul.mubr.bf16.gmra.mrb[0].mxu0 %v311
      %v371 = vpop.f32.mrb[0].mxu0
      %v372 = vadd.f32 0.0, %v371
      %v373 = vpop.f32.mrb[0].mxu0
      %v374 = vpop.f32.mrb[0].mxu0
      %v375 = vadd.f32 0.0, %v374
      %v376 = vpop.f32.mrb[0].mxu0
      %377 = vdwg.mxu0
      %v378 = vadd.f32 %v232, %v348
      %v379 = vadd.f32 %v233, %v351
      %v380 = vadd.f32 %v234, %v356
      %v381 = vadd.f32 %v235, %v359
      %v382 = vadd.f32 %v236, %v364
      %v383 = vadd.f32 %v237, %v367
      %v384 = vadd.f32 %v238, %v372
      %v385 = vadd.f32 %v239, %v375
      %386 = vst [vmem:[#allocation2] sm:$0xff] %v378
      %387 = vst [vmem:[#allocation2 + $0x8] sm:$0xff] %v379
      %388 = vst [vmem:[#allocation2 + $0x10] sm:$0xff] %v380
      %389 = vst [vmem:[#allocation2 + $0x18] sm:$0xff] %v381
      %390 = vst [vmem:[#allocation2 + $0x20] sm:$0xff] %v382
      %391 = vst [vmem:[#allocation2 + $0x28] sm:$0xff] %v383
      %392 = vst [vmem:[#allocation2 + $0x30] sm:$0xff] %v384
      %393 = vst [vmem:[#allocation2 + $0x38] sm:$0xff] %v385
      // Predicated region
      $region37: #{conv_block_forward.1} parent=31 // pred_check
        %p394 = pneg %p220
      $region38: #{conv_block_forward.1} parent=31 // pred_check_branch
        %396 = sbr.rel (%p394) target = $region40
      $region39: #{conv_block_forward.1} parent=31 // pred_region
        %v397 = vld [vmem:[#allocation2] sm:$0xff]
        %v398 = vld [vmem:[#allocation2 + $0x8] sm:$0xff]
        %v399 = vld [vmem:[#allocation2 + $0x10] sm:$0xff]
        %v400 = vld [vmem:[#allocation2 + $0x18] sm:$0xff]
        %v401 = vld [vmem:[#allocation2 + $0x20] sm:$0xff]
        %v402 = vld [vmem:[#allocation2 + $0x28] sm:$0xff]
        %v403 = vld [vmem:[#allocation2 + $0x30] sm:$0xff]
        %v404 = vld [vmem:[#allocation2 + $0x38] sm:$0xff]
        %v405 = vld [vmem:[%s2] sm:$0x1]
        %v407 = vlaneseq
        %v408 = vshrl.u32 %v407, 7
        %v409 = vsub.s32 0, %v408
        %v410 = vrot.slane %v405, %v409
        %v412 = vadd.f32 %v397, %v410
        %v413 = vadd.f32 %v398, %v410
        %v414 = vadd.f32 %v399, %v410
        %v415 = vadd.f32 %v400, %v410
        %v416 = vadd.f32 %v401, %v410
        %v417 = vadd.f32 %v402, %v410
        %v418 = vadd.f32 %v403, %v410
        %v419 = vadd.f32 %v404, %v410
        %vm420 = vcmp.gt.f32.partialorder %v412, 0.0
        %vm421 = vcmp.gt.f32.partialorder %v413, 0.0
        %vm422 = vcmp.gt.f32.partialorder %v414, 0.0
        %vm423 = vcmp.gt.f32.partialorder %v415, 0.0
        %vm424 = vcmp.gt.f32.partialorder %v416, 0.0
        %vm425 = vcmp.gt.f32.partialorder %v417, 0.0
        %vm426 = vcmp.gt.f32.partialorder %v418, 0.0
        %vm427 = vcmp.gt.f32.partialorder %v419, 0.0
        %v428 = vmul.f32 %v412, 0.2
        %v429 = vmul.f32 %v413, 0.2
        %v430 = vmul.f32 %v414, 0.2
        %v431 = vmul.f32 %v415, 0.2
        %v432 = vmul.f32 %v416, 0.2
        %v433 = vmul.f32 %v417, 0.2
        %v434 = vmul.f32 %v418, 0.2
        %v435 = vmul.f32 %v419, 0.2
        %v436 = vsel %vm420, %v412, %v428
        %v437 = vsel %vm421, %v413, %v429
        %v438 = vsel %vm422, %v414, %v430
        %v439 = vsel %vm423, %v415, %v431
        %v440 = vsel %vm424, %v416, %v432
        %v441 = vsel %vm425, %v417, %v433
        %v442 = vsel %vm426, %v418, %v434
        %v443 = vsel %vm427, %v419, %v435
        %444 = vst [vmem:[%s217] sm:$0xff] %v436
        %445 = vst [vmem:[%s217 + $0x8] sm:$0xff] %v437
        %446 = vst [vmem:[%s217 + $0x10] sm:$0xff] %v438
        %447 = vst [vmem:[%s217 + $0x18] sm:$0xff] %v439
        %448 = vst [vmem:[%s217 + $0x20] sm:$0xff] %v440
        %449 = vst [vmem:[%s217 + $0x28] sm:$0xff] %v441
        %450 = vst [vmem:[%s217 + $0x30] sm:$0xff] %v442
        %451 = vst [vmem:[%s217 + $0x38] sm:$0xff] %v443
      $region40: #{conv_block_forward.1} parent=31 // pred_fallthru
        _
      %s452 = smul.u32 8, %s18
      %p453 = scmp.lt.s32.totalorder %s452, 15
      %s454 = scalar_select %p453, %s452, 15
      %s455 = smul.addr %s454, 8
      %s456 = scalar_lea.vmem %s3, %s455
      // Predicated region
      $region41: #{conv_block_forward.1} parent=31 // pred_check
        %p457 = pneg %p119
      $region42: #{conv_block_forward.1} parent=31 // pred_check_branch
        %459 = sbr.rel (%p457) target = $region44
      $region43: #{conv_block_forward.1} parent=31 // pred_region
        %s460 = smul.u32 8, %s18
      $region44: #{conv_block_forward.1} parent=31 // pred_fallthru
        _
    $region32: #{conv_block_forward.1} parent=5 // pred_fallthru
      _
    %p461 = scmp.le.s32.totalorder 2, %s9
    // Predicated region
    $region45: #{conv_block_forward.1} parent=5 // pred_check
      %p462 = pneg %p461
    $region46: #{conv_block_forward.1} parent=5 // pred_check_branch
      %464 = sbr.rel (%p462) target = $region48
    $region47: #{conv_block_forward.1} parent=5 // pred_region
      %s465 = ssub.s32 %s9, 2
      // Predicated region
      $region49: #{conv_block_forward.1} parent=47 // pred_check
        %p466 = pneg %p125
      $region50: #{conv_block_forward.1} parent=47 // pred_check_branch
        %468 = sbr.rel (%p466) target = $region52
      $region51: #{conv_block_forward.1} parent=47 // pred_region
        %s469 = smul.u32 8, %s20
        %p470 = scmp.lt.s32.totalorder %s469, 15
        %s471 = scalar_select %p470, %s469, 15
        %s472 = smul.addr %s471, 8
        %s473 = scalar_lea.vmem %s3, %s472
      $region52: #{conv_block_forward.1} parent=47 // pred_fallthru
        _
    $region48: #{conv_block_forward.1} parent=5 // pred_fallthru
      _
  $region6: #{conv_block_forward.1} parent=0 // loop_footer
    %s13 = sadd.s32 1, %s9
  $region7: #{conv_block_forward.1} parent=0 // loop_footer_branch
    %8 = sbr.rel target = $region3
  $region8: #{conv_block_forward.1} parent=0 // loop_exit
    _

// kernel: conv_block_forward.1
$region0: #{conv_block_forward.1}
  #allocation0 [shape = 'u32[]', space=smem, size = 0x4, offset = 0x4, fixed_abs, tag = 'smem constant byte address 0x4 - core index']
  #allocation1 [shape = 'u32[144,128]{1,0:T(1,128)}', space=vmem, size = 0x12000, scoped, tag = 'internal scratch']
  #allocation2 [shape = 'f32[64,128]{1,0:T(8,128)}', space=vmem, size = 0x8000, scoped, tag = 'scratch operand']
  %s0 = inlined_call_operand.vmem [shape: bf16[128,64], index: 0, kind: input, shape index: {}]
  %s1 = inlined_call_operand.vmem [shape: bf16[64,128], index: 1, kind: input, shape index: {}]
  %s2 = inlined_call_operand.vmem [shape: f32[1,128], index: 2, kind: input, shape index: {}]
  %s3 = inlined_call_operand.vmem [shape: f32[128,128], index: 3, kind: output, shape index: {}]
  %s4 = sld [smem:[#allocation0]]
  $region53: #{conv_block_forward.1} parent=0
    _
  %s6 = ssub.s32 1, %s4
  %s7 = scalar_select 0, %s6, %s4
  loop: start=0, step=1, limit=4
  $region2: #{conv_block_forward.1} parent=0 // loop_pre_header
    _
  $region3: #{conv_block_forward.1} parent=0 // loop_header
    %s9 = sphi 0, %s13
    %p10 = scmp.ge.s32.totalorder %s9, 4
    %s16 = sphi 0, %s28
    %s17 = sphi 0, %s24
    %s18 = sphi 0, %s16
    %s19 = sphi 0, %s17
    %s20 = sphi 0, %s18
    %s21 = sphi 0, %s19
    %s33 = sphi 0, %s35
    %s36 = sphi 0, %s33
    %s37 = sphi 0, %s36
    %s53 = sphi 0, %s37
    %s59 = sphi 0, %s61
    %s62 = sphi 0, %s59
    %s63 = sphi 0, %s62
    %s79 = sphi 0, %s63
    %s83 = sphi 0, %s83
    %s85 = sphi 0, %s83
    %s86 = sphi 0, %s85
    %s100 = sphi 0, %s86
    %s106 = sphi 0, %s108
    %s109 = sphi 0, %s106
    %s110 = sphi 0, %s109
    %s126 = sphi 0, %s110
  $region4: #{conv_block_forward.1} parent=0 // loop_header_branch
    %12 = sbr.rel (%p10) target = $region8
  $region5: #{conv_block_forward.1} parent=0 // loop_body
    %s14 = ssub.s32 %s9, 1
    %s15 = ssub.s32 %s9, 2
    %s22 = sadd.s32 1, %s17
    %p23 = scmp.ge.s32.totalorder %s22, 1
    %s24 = scalar_select %p23, 0, %s22
    %s25 = sadd.s32 1, %s16
    %s26 = scalar_select %p23, %s25, %s16
    %p27 = scmp.ge.s32.totalorder %s26, 2
    %s28 = scalar_select %p27, 0, %s26
    %s29 = ssub.s32 %s16, %s28
    %s30 = ssub.s32 %s17, %s24
    %s31 = sor.u32 %s29, %s30
    %p32 = scmp.eq.s32.totalorder %s31, 0
    %s34 = sadd.s32 %s33, 1
    %s35 = scalar_select %p32, %s33, %s34
    %p38 = pneg %p32
    %p39 = scmp.eq.s32.totalorder %s9, 1
    %p40 = por %p38, %p39
    %p41 = scmp.ne.s32.totalorder %s33, %s36
    %p42 = scmp.eq.s32.totalorder %s9, 0
    %p43 = por %p41, %p42
    %p44 = scmp.ne.s32.totalorder %s33, %s36
    %p45 = scmp.eq.s32.totalorder %s14, 1
    %p46 = por %p44, %p45
    %p47 = scmp.ne.s32.totalorder %s36, %s37
    %p48 = scmp.eq.s32.totalorder %s14, 0
    %p49 = por %p47, %p48
    %p50 = scmp.ne.s32.totalorder %s36, %s37
    %p51 = scmp.eq.s32.totalorder %s15, 1
    %p52 = por %p50, %p51
    %p54 = scmp.ne.s32.totalorder %s37, %s53
    %p55 = scmp.eq.s32.totalorder %s15, 0
    %p56 = por %p54, %p55
    %s57 = ssub.s32 %s17, %s24
    %p58 = scmp.eq.s32.totalorder %s57, 0
    %s60 = sadd.s32 %s59, 1
    %s61 = scalar_select %p58, %s59, %s60
    %p64 = pneg %p58
    %p65 = scmp.eq.s32.totalorder %s9, 1
    %p66 = por %p64, %p65
    %p67 = scmp.ne.s32.totalorder %s59, %s62
    %p68 = scmp.eq.s32.totalorder %s9, 0
    %p69 = por %p67, %p68
    %p70 = scmp.ne.s32.totalorder %s59, %s62
    %p71 = scmp.eq.s32.totalorder %s14, 1
    %p72 = por %p70, %p71
    %p73 = scmp.ne.s32.totalorder %s62, %s63
    %p74 = scmp.eq.s32.totalorder %s14, 0
    %p75 = por %p73, %p74
    %p76 = scmp.ne.s32.totalorder %s62, %s63
    %p77 = scmp.eq.s32.totalorder %s15, 1
    %p78 = por %p76, %p77
    %p80 = scmp.ne.s32.totalorder %s63, %s79
    %p81 = scmp.eq.s32.totalorder %s15, 0
    %p82 = por %p80, %p81
    %s84 = sadd.s32 %s83, 1
    %p87 = scmp.eq.s32.totalorder %s9, 1
    %p88 = scmp.ne.s32.totalorder %s83, %s85
    %p89 = scmp.eq.s32.totalorder %s9, 0
    %p90 = por %p88, %p89
    %p91 = scmp.ne.s32.totalorder %s83, %s85
    %p92 = scmp.eq.s32.totalorder %s14, 1
    %p93 = por %p91, %p92
    %p94 = scmp.ne.s32.totalorder %s85, %s86
    %p95 = scmp.eq.s32.totalorder %s14, 0
    %p96 = por %p94, %p95
    %p97 = scmp.ne.s32.totalorder %s85, %s86
    %p98 = scmp.eq.s32.totalorder %s15, 1
    %p99 = por %p97, %p98
    %p101 = scmp.ne.s32.totalorder %s86, %s100
    %p102 = scmp.eq.s32.totalorder %s15, 0
    %p103 = por %p101, %p102
    %s104 = ssub.s32 %s16, %s28
    %p105 = scmp.eq.s32.totalorder %s104, 0
    %s107 = sadd.s32 %s106, 1
    %s108 = scalar_select %p105, %s106, %s107
    %p111 = pneg %p105
    %p112 = scmp.eq.s32.totalorder %s9, 1
    %p113 = por %p111, %p112
    %p114 = scmp.ne.s32.totalorder %s106, %s109
    %p115 = scmp.eq.s32.totalorder %s9, 0
    %p116 = por %p114, %p115
    %p117 = scmp.ne.s32.totalorder %s106, %s109
    %p118 = scmp.eq.s32.totalorder %s14, 1
    %p119 = por %p117, %p118
    %p120 = scmp.ne.s32.totalorder %s109, %s110
    %p121 = scmp.eq.s32.totalorder %s14, 0
    %p122 = por %p120, %p121
    %p123 = scmp.ne.s32.totalorder %s109, %s110
    %p124 = scmp.eq.s32.totalorder %s15, 1
    %p125 = por %p123, %p124
    %p127 = scmp.ne.s32.totalorder %s110, %s126
    %p128 = scmp.eq.s32.totalorder %s15, 0
    %p129 = por %p127, %p128
    %p130 = scmp.le.s32.totalorder 1, %s9
    %p131 = scmp.lt.s32.totalorder %s9, 3
    %p132 = pnand %p130, %p131
    %p133 = pneg %p132
    // Predicated region
    $region9: #{conv_block_forward.1} parent=5 // pred_check
      _
    $region10: #{conv_block_forward.1} parent=5 // pred_check_branch
      %135 = sbr.rel (%p132) target = $region12
    $region11: #{conv_block_forward.1} parent=5 // pred_region
      %s136 = ssub.s32 %s9, 1
      // Predicated region
      $region13: #{conv_block_forward.1} parent=11 // pred_check
        %p137 = pneg %p75
      $region14: #{conv_block_forward.1} parent=11 // pred_check_branch
        %139 = sbr.rel (%p137) target = $region16
      $region15: #{conv_block_forward.1} parent=11 // pred_region
        %s140 = smul.u32 8, %s19
        %p141 = scmp.lt.s32.totalorder %s140, 7
        %s142 = scalar_select %p141, %s140, 7
        %s143 = smul.addr %s142, 4
        %s144 = scalar_lea.vmem %s1, %s143
        %s145 = smul.u32 8, %s19
      $region16: #{conv_block_forward.1} parent=11 // pred_fallthru
        _
      // Predicated region
      $region17: #{conv_block_forward.1} parent=11 // pred_check
        %p146 = pneg %p96
      $region18: #{conv_block_forward.1} parent=11 // pred_check_branch
        %148 = sbr.rel (%p146) target = $region20
      $region19: #{conv_block_forward.1} parent=11 // pred_region
        _
      $region20: #{conv_block_forward.1} parent=11 // pred_fallthru
        _
    $region12: #{conv_block_forward.1} parent=5 // pred_fallthru
      _
    %p149 = scmp.lt.s32.totalorder %s9, 2
    // Predicated region
    $region21: #{conv_block_forward.1} parent=5 // pred_check
      %p150 = pneg %p149
    $region22: #{conv_block_forward.1} parent=5 // pred_check_branch
      %152 = sbr.rel (%p150) target = $region24
    $region23: #{conv_block_forward.1} parent=5 // pred_region
      // Predicated region
      $region25: #{conv_block_forward.1} parent=23 // pred_check
        %p153 = pneg %p43
      $region26: #{conv_block_forward.1} parent=23 // pred_check_branch
        %155 = sbr.rel (%p153) target = $region28
      $region27: #{conv_block_forward.1} parent=23 // pred_region
        %s156 = smul.u32 8, %s16
        %p157 = scmp.lt.s32.totalorder %s156, 15
        %s158 = scalar_select %p157, %s156, 15
        %p159 = scmp.lt.s32.totalorder %s17, 0
        %s160 = scalar_select %p159, %s17, 0
        %s161 = sadd.s32 %s160, %s158
        %s162 = smul.addr %s161, 4
        %s163 = scalar_lea.vmem %s0, %s162
        %s164 = smul.u32 8, %s16
      $region28: #{conv_block_forward.1} parent=23 // pred_fallthru
        _
    $region24: #{conv_block_forward.1} parent=5 // pred_fallthru
      _
    %p165 = scmp.le.s32.totalorder 1, %s9
    %p166 = scmp.lt.s32.totalorder %s9, 3
    %p167 = pnand %p165, %p166
    %p168 = pneg %p167
    // Predicated region
    $region29: #{conv_block_forward.1} parent=5 // pred_check
      _
    $region30: #{conv_block_forward.1} parent=5 // pred_check_branch
      %170 = sbr.rel (%p167) target = $region32
    $region31: #{conv_block_forward.1} parent=5 // pred_region
      %s171 = ssub.s32 %s9, 1
      %s172 = smul.u32 8, %s18
      %p173 = scmp.lt.s32.totalorder %s172, 15
      %s174 = scalar_select %p173, %s172, 15
      %p175 = scmp.lt.s32.totalorder %s19, 0
      %s176 = scalar_select %p175, %s19, 0
      %s177 = sadd.s32 %s176, %s174
      %s178 = smul.addr %s177, 4
      %s179 = scalar_lea.vmem %s0, %s178
      %p180 = pneg %p49
      %p181 = pneg %p46
      %s182 = smul.u32 8, %s19
      %p183 = scmp.lt.s32.totalorder %s182, 7
      %s184 = scalar_select %p183, %s182, 7
      %s185 = smul.addr %s184, 4
      %s186 = scalar_lea.vmem %s1, %s185
      %p187 = pneg %p75
      %p188 = pneg %p72
      %p189 = pneg %p96
      %p190 = pneg %p93
      %p191 = pneg %p122
      %p192 = pneg %p119
      %s193 = smul.u32 8, %s18
      %p194 = scmp.lt.s32.totalorder %s193, 15
      %s195 = scalar_select %p194, %s193, 15
      %s196 = smul.addr %s195, 8
      %s197 = scalar_lea.vmem %s3, %s196
      %s198 = smul.u32 8, %s18
      %p199 = scmp.lt.s32.totalorder %s198, 15
      %s200 = scalar_select %p199, %s198, 15
      %p201 = scmp.lt.s32.totalorder %s19, 0
      %s202 = scalar_select %p201, %s19, 0
      %s203 = sadd.s32 %s202, %s200
      %s204 = smul.addr %s203, 4
      %s205 = scalar_lea.vmem %s0, %s204
      %s206 = smul.u32 8, %s18
      %s207 = smul.u32 8, %s19
      %p208 = scmp.lt.s32.totalorder %s207, 7
      %s209 = scalar_select %p208, %s207, 7
      %s210 = smul.addr %s209, 4
      %s211 = scalar_lea.vmem %s1, %s210
      %s212 = smul.u32 8, %s19
      %s213 = smul.u32 8, %s18
      %p214 = scmp.lt.s32.totalorder %s213, 15
      %s215 = scalar_select %p214, %s213, 15
      %s216 = smul.addr %s215, 8
      %s217 = scalar_lea.vmem %s3, %s216
      %s218 = smul.u32 8, %s18
      %p220 = scmp.eq.s32.totalorder %s19, 0
      // Predicated region
      $region33: #{conv_block_forward.1} parent=31 // pred_check
        %p221 = pneg %p220
      $region34: #{conv_block_forward.1} parent=31 // pred_check_branch
        %223 = sbr.rel (%p221) target = $region36
      $region35: #{conv_block_forward.1} parent=31 // pred_region
        %224 = vst [vmem:[#allocation2] sm:$0xff] 0.0
        %225 = vst [vmem:[#allocation2 + $0x8] sm:$0xff] 0.0
        %226 = vst [vmem:[#allocation2 + $0x10] sm:$0xff] 0.0
        %227 = vst [vmem:[#allocation2 + $0x18] sm:$0xff] 0.0
        %228 = vst [vmem:[#allocation2 + $0x20] sm:$0xff] 0.0
        %229 = vst [vmem:[#allocation2 + $0x28] sm:$0xff] 0.0
        %230 = vst [vmem:[#allocation2 + $0x30] sm:$0xff] 0.0
        %231 = vst [vmem:[#allocation2 + $0x38] sm:$0xff] 0.0
      $region36: #{conv_block_forward.1} parent=31 // pred_fallthru
        _
      %v232 = vld [vmem:[#allocation2] sm:$0xff]
      %v233 = vld [vmem:[#allocation2 + $0x8] sm:$0xff]
      %v234 = vld [vmem:[#allocation2 + $0x10] sm:$0xff]
      %v235 = vld [vmem:[#allocation2 + $0x18] sm:$0xff]
      %v236 = vld [vmem:[#allocation2 + $0x20] sm:$0xff]
      %v237 = vld [vmem:[#allocation2 + $0x28] sm:$0xff]
      %v238 = vld [vmem:[#allocation2 + $0x30] sm:$0xff]
      %v239 = vld [vmem:[#allocation2 + $0x38] sm:$0xff]
      %v240 = vld [vmem:[%s205] sm:$0xf]
      %v241 = vld [vmem:[%s205 + $0x4] sm:$0xf]
      %v242 = vld [vmem:[%s205 + $0x8] sm:$0xf]
      %v243 = vld [vmem:[%s205 + $0xc] sm:$0xf]
      %v244 = vld [vmem:[%s205 + $0x10] sm:$0xf]
      %v245 = vld [vmem:[%s205 + $0x14] sm:$0xf]
      %v246 = vld [vmem:[%s205 + $0x18] sm:$0xf]
      %v247 = vld [vmem:[%s205 + $0x1c] sm:$0xf]
      %v248 = vld [vmem:[%s211] sm:$0xf]
      %v249 = vld [vmem:[%s211 + $0x4] sm:$0xf]
      %v250 = vld [vmem:[%s211 + $0x8] sm:$0xf]
      %v251 = vld [vmem:[%s211 + $0xc] sm:$0xf]
      %v252 = vld [vmem:[%s211 + $0x10] sm:$0xf]
      %v253 = vld [vmem:[%s211 + $0x14] sm:$0xf]
      %v254 = vld [vmem:[%s211 + $0x18] sm:$0xf]
      %v255 = vld [vmem:[%s211 + $0x1c] sm:$0xf]
      %v264 = vunpack.c.l.b16 %v240
      %v265 = vunpack.c.l.b16 %v241
      %v266 = vunpack.c.l.b16 %v242
      %v267 = vunpack.c.l.b16 %v243
      %v268 = vunpack.c.l.b16 %v244
      %v269 = vunpack.c.l.b16 %v245
      %v270 = vunpack.c.l.b16 %v246
      %v271 = vunpack.c.l.b16 %v247
      %v272 = vpack.c.b16 %v265, %v264
      %v273 = vpack.c.b16 %v267, %v266
      %v274 = vpack.c.b16 %v269, %v268
      %v275 = vpack.c.b16 %v271, %v270
      %v284 = vunpack.c.l.b16 %v248
      %v285 = vunpack.c.l.b16 %v249
      %v286 = vunpack.c.l.b16 %v250
      %v287 = vunpack.c.l.b16 %v251
      %v288 = vunpack.c.l.b16 %v252
      %v289 = vunpack.c.l.b16 %v253
      %v290 = vunpack.c.l.b16 %v254
      %v291 = vunpack.c.l.b16 %v255
      %v292 = vpack.c.b16 %v285, %v284
      %v293 = vpack.c.b16 %v287, %v286
      %v294 = vpack.c.b16 %v289, %v288
      %v295 = vpack.c.b16 %v291, %v290
      %vm300 = vcmask 523264
      %v302 = vsel %vm300, %v272, 0
      %v305 = vsel %vm300, %v273, 0
      %v308 = vsel %vm300, %v274, 0
      %v311 = vsel %vm300, %v275, 0
      %313 = vmatprep.subr.bf16.mxu0 0
      %314 = vmatpush1.bf16.msra.mxu0 %v292
      %315 = vmatprep.subr.bf16.mxu0 0
      %316 = vmatpush1.bf16.msra.mxu0 %v293
      %317 = vmatprep.subr.bf16.mxu0 0
      %318 = vmatpush1.bf16.msra.mxu0 %v294
      %319 = vmatprep.subr.bf16.mxu0 0
      %320 = vmatpush1.bf16.msra.mxu0 %v295
      %321 = vmatprep.subr.bf16.mxu0 0
      %322 = vmatpush1.bf16.msra.mxu0 0
      %323 = vmatprep.subr.bf16.mxu0 0
      %324 = vmatpush1.bf16.msra.mxu0 0
      %325 = vmatprep.subr.bf16.mxu0 0
      %326 = vmatpush1.bf16.msra.mxu0 0
      %327 = vmatprep.subr.bf16.mxu0 0
      %328 = vmatpush1.bf16.msra.mxu0 0
      %329 = vmatprep.subr.bf16.mxu0 0
      %330 = vmatpush1.bf16.msra.mxu0 0
      %331 = vmatprep.subr.bf16.mxu0 0
      %332 = vmatpush1.bf16.msra.mxu0 0
      %333 = vmatprep.subr.bf16.mxu0 0
      %334 = vmatpush1.bf16.msra.mxu0 0
      %335 = vmatprep.subr.bf16.mxu0 0
      %336 = vmatpush1.bf16.msra.mxu0 0
      %337 = vmatprep.subr.bf16.mxu0 0
      %338 = vmatpush1.bf16.msra.mxu0 0
      %339 = vmatprep.subr.bf16.mxu0 0
      %340 = vmatpush1.bf16.msra.mxu0 0
      %341 = vmatprep.subr.bf16.mxu0 0
      %342 = vmatpush1.bf16.msra.mxu0 0
      %343 = vmatprep.subr.bf16.mxu0 0
      %344 = vmatpush1.bf16.msra.mxu0 0
      %345 = vmatprep.mubr.bf16.mxu0 0
      %346 = vmatmul.mubr.bf16.gmra.mrb[0].mxu0 %v302
      %v347 = vpop.f32.mrb[0].mxu0
      %v348 = vadd.f32 0.0, %v347
      %v349 = vpop.f32.mrb[0].mxu0
      %v350 = vpop.f32.mrb[0].mxu0
      %v351 = vadd.f32 0.0, %v350
      %v352 = vpop.f32.mrb[0].mxu0
      %353 = vmatprep.mubr.bf16.mxu0 0
      %354 = vmatmul.mubr.bf16.gmra.mrb[0].mxu0 %v305
      %v355 = vpop.f32.mrb[0].mxu0
      %v356 = vadd.f32 0.0, %v355
      %v357 = vpop.f32.mrb[0].mxu0
      %v358 = vpop.f32.mrb[0].mxu0
      %v359 = vadd.f32 0.0, %v358
      %v360 = vpop.f32.mrb[0].mxu0
      %361 = vmatprep.mubr.bf16.mxu0 0
      %362 = vmatmul.mubr.bf16.gmra.mrb[0].mxu0 %v308
      %v363 = vpop.f32.mrb[0].mxu0
      %v364 = vadd.f32 0.0, %v363
      %v365 = vpop.f32.mrb[0].mxu0
      %v366 = vpop.f32.mrb[0].mxu0
      %v367 = vadd.f32 0.0, %v366
      %v368 = vpop.f32.mrb[0].mxu0
      %369 = vmatprep.mubr.bf16.mxu0 0
      %370 = vmatmul.mubr.bf16.gmra.mrb[0].mxu0 %v311
      %v371 = vpop.f32.mrb[0].mxu0
      %v372 = vadd.f32 0.0, %v371
      %v373 = vpop.f32.mrb[0].mxu0
      %v374 = vpop.f32.mrb[0].mxu0
      %v375 = vadd.f32 0.0, %v374
      %v376 = vpop.f32.mrb[0].mxu0
      %377 = vdwg.mxu0
      %v378 = vadd.f32 %v232, %v348
      %v379 = vadd.f32 %v233, %v351
      %v380 = vadd.f32 %v234, %v356
      %v381 = vadd.f32 %v235, %v359
      %v382 = vadd.f32 %v236, %v364
      %v383 = vadd.f32 %v237, %v367
      %v384 = vadd.f32 %v238, %v372
      %v385 = vadd.f32 %v239, %v375
      %386 = vst [vmem:[#allocation2] sm:$0xff] %v378
      %387 = vst [vmem:[#allocation2 + $0x8] sm:$0xff] %v379
      %388 = vst [vmem:[#allocation2 + $0x10] sm:$0xff] %v380
      %389 = vst [vmem:[#allocation2 + $0x18] sm:$0xff] %v381
      %390 = vst [vmem:[#allocation2 + $0x20] sm:$0xff] %v382
      %391 = vst [vmem:[#allocation2 + $0x28] sm:$0xff] %v383
      %392 = vst [vmem:[#allocation2 + $0x30] sm:$0xff] %v384
      %393 = vst [vmem:[#allocation2 + $0x38] sm:$0xff] %v385
      // Predicated region
      $region37: #{conv_block_forward.1} parent=31 // pred_check
        %p394 = pneg %p220
      $region38: #{conv_block_forward.1} parent=31 // pred_check_branch
        %396 = sbr.rel (%p394) target = $region40
      $region39: #{conv_block_forward.1} parent=31 // pred_region
        %v397 = vld [vmem:[#allocation2] sm:$0xff]
        %v398 = vld [vmem:[#allocation2 + $0x8] sm:$0xff]
        %v399 = vld [vmem:[#allocation2 + $0x10] sm:$0xff]
        %v400 = vld [vmem:[#allocation2 + $0x18] sm:$0xff]
        %v401 = vld [vmem:[#allocation2 + $0x20] sm:$0xff]
        %v402 = vld [vmem:[#allocation2 + $0x28] sm:$0xff]
        %v403 = vld [vmem:[#allocation2 + $0x30] sm:$0xff]
        %v404 = vld [vmem:[#allocation2 + $0x38] sm:$0xff]
        %v405 = vld [vmem:[%s2] sm:$0x1]
        %v407 = vlaneseq
        %v408 = vshrl.u32 %v407, 7
        %v409 = vsub.s32 0, %v408
        %v410 = vrot.slane %v405, %v409
        %v412 = vadd.f32 %v397, %v410
        %v413 = vadd.f32 %v398, %v410
        %v414 = vadd.f32 %v399, %v410
        %v415 = vadd.f32 %v400, %v410
        %v416 = vadd.f32 %v401, %v410
        %v417 = vadd.f32 %v402, %v410
        %v418 = vadd.f32 %v403, %v410
        %v419 = vadd.f32 %v404, %v410
        %vm420 = vcmp.gt.f32.partialorder %v412, 0.0
        %vm421 = vcmp.gt.f32.partialorder %v413, 0.0
        %vm422 = vcmp.gt.f32.partialorder %v414, 0.0
        %vm423 = vcmp.gt.f32.partialorder %v415, 0.0
        %vm424 = vcmp.gt.f32.partialorder %v416, 0.0
        %vm425 = vcmp.gt.f32.partialorder %v417, 0.0
        %vm426 = vcmp.gt.f32.partialorder %v418, 0.0
        %vm427 = vcmp.gt.f32.partialorder %v419, 0.0
        %v428 = vmul.f32 %v412, 0.2
        %v429 = vmul.f32 %v413, 0.2
        %v430 = vmul.f32 %v414, 0.2
        %v431 = vmul.f32 %v415, 0.2
        %v432 = vmul.f32 %v416, 0.2
        %v433 = vmul.f32 %v417, 0.2
        %v434 = vmul.f32 %v418, 0.2
        %v435 = vmul.f32 %v419, 0.2
        %v436 = vsel %vm420, %v412, %v428
        %v437 = vsel %vm421, %v413, %v429
        %v438 = vsel %vm422, %v414, %v430
        %v439 = vsel %vm423, %v415, %v431
        %v440 = vsel %vm424, %v416, %v432
        %v441 = vsel %vm425, %v417, %v433
        %v442 = vsel %vm426, %v418, %v434
        %v443 = vsel %vm427, %v419, %v435
        %444 = vst [vmem:[%s217] sm:$0xff] %v436
        %445 = vst [vmem:[%s217 + $0x8] sm:$0xff] %v437
        %446 = vst [vmem:[%s217 + $0x10] sm:$0xff] %v438
        %447 = vst [vmem:[%s217 + $0x18] sm:$0xff] %v439
        %448 = vst [vmem:[%s217 + $0x20] sm:$0xff] %v440
        %449 = vst [vmem:[%s217 + $0x28] sm:$0xff] %v441
        %450 = vst [vmem:[%s217 + $0x30] sm:$0xff] %v442
        %451 = vst [vmem:[%s217 + $0x38] sm:$0xff] %v443
      $region40: #{conv_block_forward.1} parent=31 // pred_fallthru
        _
      %s452 = smul.u32 8, %s18
      %p453 = scmp.lt.s32.totalorder %s452, 15
      %s454 = scalar_select %p453, %s452, 15
      %s455 = smul.addr %s454, 8
      %s456 = scalar_lea.vmem %s3, %s455
      // Predicated region
      $region41: #{conv_block_forward.1} parent=31 // pred_check
        %p457 = pneg %p119
      $region42: #{conv_block_forward.1} parent=31 // pred_check_branch
        %459 = sbr.rel (%p457) target = $region44
      $region43: #{conv_block_forward.1} parent=31 // pred_region
        %s460 = smul.u32 8, %s18
      $region44: #{conv_block_forward.1} parent=31 // pred_fallthru
        _
    $region32: #{conv_block_forward.1} parent=5 // pred_fallthru
      _
    %p461 = scmp.le.s32.totalorder 2, %s9
    // Predicated region
    $region45: #{conv_block_forward.1} parent=5 // pred_check
      %p462 = pneg %p461
    $region46: #{conv_block_forward.1} parent=5 // pred_check_branch
      %464 = sbr.rel (%p462) target = $region48
    $region47: #{conv_block_forward.1} parent=5 // pred_region
      %s465 = ssub.s32 %s9, 2
      // Predicated region
      $region49: #{conv_block_forward.1} parent=47 // pred_check
        %p466 = pneg %p125
      $region50: #{conv_block_forward.1} parent=47 // pred_check_branch
        %468 = sbr.rel (%p466) target = $region52
      $region51: #{conv_block_forward.1} parent=47 // pred_region
        %s469 = smul.u32 8, %s20
        %p470 = scmp.lt.s32.totalorder %s469, 15
        %s471 = scalar_select %p470, %s469, 15
        %s472 = smul.addr %s471, 8
        %s473 = scalar_lea.vmem %s3, %s472
      $region52: #{conv_block_forward.1} parent=47 // pred_fallthru
        _
    $region48: #{conv_block_forward.1} parent=5 // pred_fallthru
      _
  $region6: #{conv_block_forward.1} parent=0 // loop_footer
    %s13 = sadd.s32 1, %s9
  $region7: #{conv_block_forward.1} parent=0 // loop_footer_branch
    %8 = sbr.rel target = $region3
  $region8: #{conv_block_forward.1} parent=0 // loop_exit
    _

</llo_original>
